<compile_context>
chip_gen: v5e
topology: v5e:2x2
jax: 0.10.0
libtpu: 0.0.40
codegen_flags: <defaults>
</compile_context>

<pallas_src>
import functools

import jax
import jax.numpy as jnp
from jax.experimental import pallas as pl
from jax.experimental.pallas import tpu as pltpu


def _sep_conv1d_kernel(x_ref, wdw_ref, wpw_ref, bpw_ref, scale_ref, shift_ref,
                       o_ref, *scratch, kernel, stride, pad, l_out):
    """One grid step == one batch element; every tile is 2-D (channels, L)."""
    c_in, l_in = x_ref.shape

    if pad > 0:
        xpad_ref, = scratch
        # Stage x into the zero-haloed f32 scratch.  The halo is re-zeroed
        # every step, so there is no cross-step state (safe under "parallel").
        zero_halo = jnp.zeros((c_in, pad), jnp.float32)
        xpad_ref[:, 0:pad] = zero_halo
        xpad_ref[:, pad + l_in:2 * pad + l_in] = zero_halo
        xpad_ref[:, pad:pad + l_in] = x_ref[...].astype(jnp.float32)
        src = xpad_ref
    else:
        # No padding -> read taps straight from the input tile (no extra copy).
        src = x_ref

    # ---- depthwise conv (groups = C_in): small static tap loop on the VPU.
    # Each tap is a Ref-level (optionally strided) load; the per-channel weight
    # column is a (C_in, 1) load directly from the weight ref.
    acc = None
    for k in range(kernel):                                  # tiny static unroll
        if stride == 1:
            xs = src[:, pl.ds(k, l_out)]                     # (C_in, L_out)
        else:
            xs = src[:, pl.ds(k, l_out, stride)]             # strided ref load
        term = xs.astype(jnp.float32) * wdw_ref[:, k:k + 1].astype(jnp.float32)
        acc = term if acc is None else acc + term
    # (depthwise bias is folded into the pointwise bias wrapper-side)

    # ---- pointwise 1x1 conv: single lane-dense 2-D matmul on the MXU ----
    wpw = wpw_ref[...].astype(jnp.float32)                   # (C_out, C_in)
    y = jnp.dot(wpw, acc, preferred_element_type=jnp.float32)  # (C_out, L_out)
    y = y + bpw_ref[...]                                     # folded (b_pw + w_pw @ b_dw)

    # ---- activation (ReLU) ----
    y = jnp.maximum(y, 0.0)

    # ---- BatchNorm1d (eval, running stats) folded to one scale/shift FMA ----
    y = y * scale_ref[...] + shift_ref[...]

    # ---- Dropout: eval mode => identity ----
    # TODO(synk): train-mode dropout (pltpu.prng_* mask + 1/(1-p) scaling) not emitted.

    o_ref[...] = y.astype(o_ref.dtype)


def sep_conv1d(x, params, *, kernel, stride, pad, eps=1e-5):
    """x: (N, C_in, L) float32.  Returns (N, C_out, L_out) float32 (eval forward)."""
    n, c_in, l = x.shape
    c_out = params['w_pw'].shape[0]
    l_out = (l + 2 * pad - kernel) // stride + 1

    # O(C) constant folding on the XLA side (strictly cheaper than in-kernel):
    scale = (params['gamma'] *
             jax.lax.rsqrt(params['running_var'] + eps)).astype(jnp.float32)
    shift = (params['beta'] - params['running_mean'] * scale).astype(jnp.float32)
    # pointwise(depthwise(x) + b_dw) == pointwise(depthwise(x)) + (b_pw + w_pw @ b_dw)
    # (valid: ReLU is applied after the pointwise conv)
    b_pw_fold = (params['b_pw'] + params['w_pw'] @ params['b_dw']).astype(jnp.float32)

    kern = functools.partial(_sep_conv1d_kernel, kernel=kernel, stride=stride,
                             pad=pad, l_out=l_out)

    scratch_shapes = []
    if pad > 0:
        scratch_shapes.append(pltpu.VMEM((c_in, l + 2 * pad), jnp.float32))

    return pl.pallas_call(
        kern,
        out_shape=jax.ShapeDtypeStruct((n, c_out, l_out), jnp.float32),
        grid=(n,),
        in_specs=[
            pl.BlockSpec((None, c_in, l), lambda i: (i, 0, 0)),   # x: one batch elem/step
            pl.BlockSpec((c_in, kernel), lambda i: (0, 0)),       # w_dw  (resident)
            pl.BlockSpec((c_out, c_in), lambda i: (0, 0)),        # w_pw  (resident)
            pl.BlockSpec((c_out, 1), lambda i: (0, 0)),           # folded bias
            pl.BlockSpec((c_out, 1), lambda i: (0, 0)),           # bn scale
            pl.BlockSpec((c_out, 1), lambda i: (0, 0)),           # bn shift
        ],
        out_specs=pl.BlockSpec((None, c_out, l_out), lambda i: (i, 0, 0)),
        scratch_shapes=scratch_shapes,
        compiler_params=pltpu.CompilerParams(
            dimension_semantics=("parallel",),          # shard batch across TCs (v7x)
            vmem_limit_bytes=32 * 1024 * 1024),         # safe scoped budget on v5e/v6e/v7x
    )(x, params['w_dw'], params['w_pw'], b_pw_fold, scale, shift)


def _reference(x, params, *, kernel, stride, pad, eps=1e-5):
    """Pure-JAX reference mirroring the PyTorch module (eval mode)."""
    x_pad = jnp.pad(x, ((0, 0), (0, 0), (pad, pad)))
    l_out = (x.shape[2] + 2 * pad - kernel) // stride + 1
    acc = jnp.zeros((x.shape[0], x.shape[1], l_out), jnp.float32)
    for k in range(kernel):
        xs = x_pad[:, :, k: k + (l_out - 1) * stride + 1: stride]
        acc = acc + xs * params['w_dw'][:, k:k + 1][None, :, :]
    acc = acc + params['b_dw'][None, :, :]
    y = jnp.einsum('oc,ncl->nol', params['w_pw'], acc) + params['b_pw'][None, :, :]
    y = jnp.maximum(y, 0.0)
    y = (y - params['running_mean'][None, :, :]) \
        * jax.lax.rsqrt(params['running_var'][None, :, :] + eps) \
        * params['gamma'][None, :, :] + params['beta'][None, :, :]
    return y


if __name__ == "__main__":
    # hparams (matches the PyTorch module __init__ dict):
    #   num_in=4, num_out=8, kernel=3, stride=1, pad=1,
    #   activ=nn.ReLU(), batch_norm=True, dropout=0.1 (eval -> identity)
    NUM_IN, NUM_OUT, KERNEL, STRIDE, PAD = 4, 8, 3, 1, 1
    N, L = 2, 16

    key = jax.random.PRNGKey(0)
    keys = jax.random.split(key, 9)

    params = {
        'w_dw': 0.2 * jax.random.normal(keys[0], (NUM_IN, KERNEL), jnp.float32),
        'b_dw': 0.1 * jax.random.normal(keys[1], (NUM_IN, 1), jnp.float32),
        'w_pw': 0.2 * jax.random.normal(keys[2], (NUM_OUT, NUM_IN), jnp.float32),
        'b_pw': 0.1 * jax.random.normal(keys[3], (NUM_OUT, 1), jnp.float32),
        'gamma': 1.0 + 0.1 * jax.random.normal(keys[4], (NUM_OUT, 1), jnp.float32),
        'beta': 0.1 * jax.random.normal(keys[5], (NUM_OUT, 1), jnp.float32),
        'running_mean': 0.1 * jax.random.normal(keys[6], (NUM_OUT, 1), jnp.float32),
        'running_var': 0.5 + jax.random.uniform(keys[7], (NUM_OUT, 1), jnp.float32),
    }

    x = jax.random.normal(keys[8], (N, NUM_IN, L), jnp.float32)

    out = sep_conv1d(x, params, kernel=KERNEL, stride=STRIDE, pad=PAD)
    out = jax.block_until_ready(out)

    ref = _reference(x, params, kernel=KERNEL, stride=STRIDE, pad=PAD)
    assert out.shape == (N, NUM_OUT, (L + 2 * PAD - KERNEL) // STRIDE + 1)
    assert jnp.allclose(out, ref, atol=1e-4, rtol=1e-4), "mismatch vs reference"

    print("KERNEL_OK")
</pallas_src>

<mosaic_0001>
module attributes {stable_mosaic.version = 11 : i64} {
  func.func @_sep_conv1d_kernel(%arg0: i32, %arg1: memref<1x4x16xf32, #tpu.memory_space<vmem>>, %arg2: memref<4x3xf32, #tpu.memory_space<vmem>>, %arg3: memref<8x4xf32, #tpu.memory_space<vmem>>, %arg4: memref<8x1xf32, #tpu.memory_space<vmem>>, %arg5: memref<8x1xf32, #tpu.memory_space<vmem>>, %arg6: memref<8x1xf32, #tpu.memory_space<vmem>>, %arg7: memref<1x8x16xf32, #tpu.memory_space<vmem>>, %arg8: memref<4x18xf32, #tpu.memory_space<vmem>>) attributes {dimension_semantics = [#tpu.dimension_semantics<parallel>], iteration_bounds = array<i64: 2>, scalar_prefetch = 0 : i64, scratch_operands = 1 : i64, tpu.core_type = #tpu.core_type<tc>, window_params = [{transform_indices = @transform_0, window_bounds = array<i64: 1, 4, 16>}, {pipeline_mode = #tpu.pipeline_mode<synchronous>, transform_indices = @transform_1, window_bounds = array<i64: 4, 3>}, {pipeline_mode = #tpu.pipeline_mode<synchronous>, transform_indices = @transform_2, window_bounds = array<i64: 8, 4>}, {pipeline_mode = #tpu.pipeline_mode<synchronous>, transform_indices = @transform_3, window_bounds = array<i64: 8, 1>}, {pipeline_mode = #tpu.pipeline_mode<synchronous>, transform_indices = @transform_4, window_bounds = array<i64: 8, 1>}, {pipeline_mode = #tpu.pipeline_mode<synchronous>, transform_indices = @transform_5, window_bounds = array<i64: 8, 1>}, {transform_indices = @transform_6, window_bounds = array<i64: 1, 8, 16>}]} {
    %cst = arith.constant 0.000000e+00 : f32
    %0 = vector.broadcast %cst : f32 to vector<4x1xf32>
    %c0 = arith.constant 0 : index
    %c0_0 = arith.constant 0 : index
    %1 = vector.load %arg8[%c0, %c0_0] : memref<4x18xf32, #tpu.memory_space<vmem>>, vector<4x1xf32>
    tpu.vector_store %arg8[%c0, %c0_0], %0 {strides = array<i32>} : memref<4x18xf32, #tpu.memory_space<vmem>>, vector<4x1xf32>,
    %c0_1 = arith.constant 0 : index
    %c17 = arith.constant 17 : index
    %2 = vector.load %arg8[%c0_1, %c17] : memref<4x18xf32, #tpu.memory_space<vmem>>, vector<4x1xf32>
    tpu.vector_store %arg8[%c0_1, %c17], %0 {strides = array<i32>} : memref<4x18xf32, #tpu.memory_space<vmem>>, vector<4x1xf32>,
    %c0_2 = arith.constant 0 : index
    %c0_3 = arith.constant 0 : index
    %c0_4 = arith.constant 0 : index
    %3 = vector.load %arg1[%c0_2, %c0_3, %c0_4] : memref<1x4x16xf32, #tpu.memory_space<vmem>>, vector<1x4x16xf32>
    %4 = vector.shape_cast %3 : vector<1x4x16xf32> to vector<4x16xf32>
    %c0_5 = arith.constant 0 : index
    %c1 = arith.constant 1 : index
    %5 = vector.load %arg8[%c0_5, %c1] : memref<4x18xf32, #tpu.memory_space<vmem>>, vector<4x16xf32>
    tpu.vector_store %arg8[%c0_5, %c1], %4 {strides = array<i32>} : memref<4x18xf32, #tpu.memory_space<vmem>>, vector<4x16xf32>,
    %c0_6 = arith.constant 0 : index
    %c0_7 = arith.constant 0 : index
    %6 = vector.load %arg8[%c0_6, %c0_7] : memref<4x18xf32, #tpu.memory_space<vmem>>, vector<4x16xf32>
    %c0_8 = arith.constant 0 : index
    %c0_9 = arith.constant 0 : index
    %7 = vector.load %arg2[%c0_8, %c0_9] : memref<4x3xf32, #tpu.memory_space<vmem>>, vector<4x1xf32>
    %8 = vector.broadcast %7 : vector<4x1xf32> to vector<4x16xf32>
    %9 = arith.mulf %6, %8 : vector<4x16xf32>
    %c0_10 = arith.constant 0 : index
    %c1_11 = arith.constant 1 : index
    %10 = vector.load %arg8[%c0_10, %c1_11] : memref<4x18xf32, #tpu.memory_space<vmem>>, vector<4x16xf32>
    %c0_12 = arith.constant 0 : index
    %c1_13 = arith.constant 1 : index
    %11 = vector.load %arg2[%c0_12, %c1_13] : memref<4x3xf32, #tpu.memory_space<vmem>>, vector<4x1xf32>
    %12 = vector.broadcast %11 : vector<4x1xf32> to vector<4x16xf32>
    %13 = arith.mulf %10, %12 : vector<4x16xf32>
    %14 = arith.addf %9, %13 : vector<4x16xf32>
    %c0_14 = arith.constant 0 : index
    %c2 = arith.constant 2 : index
    %15 = vector.load %arg8[%c0_14, %c2] : memref<4x18xf32, #tpu.memory_space<vmem>>, vector<4x16xf32>
    %c0_15 = arith.constant 0 : index
    %c2_16 = arith.constant 2 : index
    %16 = vector.load %arg2[%c0_15, %c2_16] : memref<4x3xf32, #tpu.memory_space<vmem>>, vector<4x1xf32>
    %17 = vector.broadcast %16 : vector<4x1xf32> to vector<4x16xf32>
    %18 = arith.mulf %15, %17 : vector<4x16xf32>
    %19 = arith.addf %14, %18 : vector<4x16xf32>
    %c0_17 = arith.constant 0 : index
    %c0_18 = arith.constant 0 : index
    %20 = vector.load %arg3[%c0_17, %c0_18] : memref<8x4xf32, #tpu.memory_space<vmem>>, vector<8x4xf32>
    %cst_19 = arith.constant dense<0.000000e+00> : vector<8x16xf32>
    %21 = tpu.matmul %20, %19, %cst_19 {dimension_numbers = #tpu.dot_dimension_numbers<[1], [0], [0], [1], [0, 0, 1, 1], [], []>} : vector<8x4xf32>, vector<4x16xf32>, vector<8x16xf32> -> vector<8x16xf32>
    %c0_20 = arith.constant 0 : index
    %c0_21 = arith.constant 0 : index
    %22 = vector.load %arg4[%c0_20, %c0_21] : memref<8x1xf32, #tpu.memory_space<vmem>>, vector<8x1xf32>
    %23 = vector.broadcast %22 : vector<8x1xf32> to vector<8x16xf32>
    %24 = arith.addf %21, %23 : vector<8x16xf32>
    %cst_22 = arith.constant 0.000000e+00 : f32
    %25 = vector.broadcast %cst_22 : f32 to vector<8x16xf32>
    %26 = arith.maximumf %24, %25 : vector<8x16xf32>
    %c0_23 = arith.constant 0 : index
    %c0_24 = arith.constant 0 : index
    %27 = vector.load %arg5[%c0_23, %c0_24] : memref<8x1xf32, #tpu.memory_space<vmem>>, vector<8x1xf32>
    %28 = vector.broadcast %27 : vector<8x1xf32> to vector<8x16xf32>
    %29 = arith.mulf %26, %28 : vector<8x16xf32>
    %c0_25 = arith.constant 0 : index
    %c0_26 = arith.constant 0 : index
    %30 = vector.load %arg6[%c0_25, %c0_26] : memref<8x1xf32, #tpu.memory_space<vmem>>, vector<8x1xf32>
    %31 = vector.broadcast %30 : vector<8x1xf32> to vector<8x16xf32>
    %32 = arith.addf %29, %31 : vector<8x16xf32>
    %c0_27 = arith.constant 0 : index
    %c0_28 = arith.constant 0 : index
    %c0_29 = arith.constant 0 : index
    %33 = vector.load %arg7[%c0_27, %c0_28, %c0_29] : memref<1x8x16xf32, #tpu.memory_space<vmem>>, vector<1x8x16xf32>
    %34 = vector.shape_cast %33 : vector<1x8x16xf32> to vector<8x16xf32>
    %35 = vector.shape_cast %32 : vector<8x16xf32> to vector<1x8x16xf32>
    tpu.vector_store %arg7[%c0_27, %c0_28, %c0_29], %35 {strides = array<i32>} : memref<1x8x16xf32, #tpu.memory_space<vmem>>, vector<1x8x16xf32>,
    return
  }
  func.func @transform_0(%arg0: i32) -> (i32, i32, i32) {
    %c0_i32 = arith.constant 0 : i32
    %c0_i32_0 = arith.constant 0 : i32
    %c0_i32_1 = arith.constant 0 : i32
    return %arg0, %c0_i32, %c0_i32_0 : i32, i32, i32
  }
  func.func @transform_1(%arg0: i32) -> (i32, i32) {
    %c0_i32 = arith.constant 0 : i32
    %c0_i32_0 = arith.constant 0 : i32
    %c0_i32_1 = arith.constant 0 : i32
    return %c0_i32, %c0_i32_0 : i32, i32
  }
  func.func @transform_2(%arg0: i32) -> (i32, i32) {
    %c0_i32 = arith.constant 0 : i32
    %c0_i32_0 = arith.constant 0 : i32
    %c0_i32_1 = arith.constant 0 : i32
    return %c0_i32, %c0_i32_0 : i32, i32
  }
  func.func @transform_3(%arg0: i32) -> (i32, i32) {
    %c0_i32 = arith.constant 0 : i32
    %c0_i32_0 = arith.constant 0 : i32
    %c0_i32_1 = arith.constant 0 : i32
    return %c0_i32, %c0_i32_0 : i32, i32
  }
  func.func @transform_4(%arg0: i32) -> (i32, i32) {
    %c0_i32 = arith.constant 0 : i32
    %c0_i32_0 = arith.constant 0 : i32
    %c0_i32_1 = arith.constant 0 : i32
    return %c0_i32, %c0_i32_0 : i32, i32
  }
  func.func @transform_5(%arg0: i32) -> (i32, i32) {
    %c0_i32 = arith.constant 0 : i32
    %c0_i32_0 = arith.constant 0 : i32
    %c0_i32_1 = arith.constant 0 : i32
    return %c0_i32, %c0_i32_0 : i32, i32
  }
  func.func @transform_6(%arg0: i32) -> (i32, i32, i32) {
    %c0_i32 = arith.constant 0 : i32
    %c0_i32_0 = arith.constant 0 : i32
    %c0_i32_1 = arith.constant 0 : i32
    return %arg0, %c0_i32, %c0_i32_0 : i32, i32, i32
  }
}

</mosaic_0001>

<llo_original>
// kernel: tpu_custom_call.1
$region0: #{tpu_custom_call.1}
  #allocation0 [shape = 'u32[]', space=smem, size = 0x4, offset = 0x4, fixed_abs, tag = 'smem constant byte address 0x4 - core index']
  #allocation1 [shape = 'u32[72,128]{1,0:T(1,128)}', space=vmem, size = 0x9000, scoped, tag = 'internal scratch']
  #allocation2 [shape = 'f32[4,18]{1,0:T(4,128)}', space=vmem, size = 0x800, scoped, tag = 'scratch operand']
  %s0 = inlined_call_operand.vmem [shape: f32[2,4,16], index: 0, kind: input, shape index: {}]
  %s1 = inlined_call_operand.vmem [shape: f32[4,3], index: 1, kind: input, shape index: {}]
  %s2 = inlined_call_operand.vmem [shape: f32[8,4], index: 2, kind: input, shape index: {}]
  %s3 = inlined_call_operand.vmem [shape: f32[8,1], index: 3, kind: input, shape index: {}]
  %s4 = inlined_call_operand.vmem [shape: f32[8,1], index: 4, kind: input, shape index: {}]
  %s5 = inlined_call_operand.vmem [shape: f32[8,1], index: 5, kind: input, shape index: {}]
  %s6 = inlined_call_operand.hbm [shape: f32[2,8,16], index: 6, kind: output, shape index: {}]
  %s7 = sld [smem:[#allocation0]]
  $region57: #{tpu_custom_call.1} parent=0
    _
  %s9 = ssub.s32 1, %s7
  %s10 = scalar_select 0, %s9, %s7
  $region1: #{tpu_custom_call.1} parent=0
    #allocation3 [shape = 'u8[8192]{0}', space=vmem, size = 0x2000, scoped, tag = 'output window, operand 0']
    #allocation4 [shape = 's32[2]{0}', space=sflag, size = 0x8, scoped, tag = 'scoped memory for tpu_custom_call.1']
    %11 = vsyncpa [#allocation4], 0
    %s12 = scalar_lea.sflag [#allocation4], 1
    %13 = vsyncpa %s12, 0
    loop: start=0, step=1, limit=4
    $region2: #{tpu_custom_call.1} parent=1 // loop_pre_header
      _
    $region3: #{tpu_custom_call.1} parent=1 // loop_header
      %s15 = sphi 0, %s19
      %p16 = scmp.ge.s32.totalorder %s15, 4
      %s25 = sphi 0, %s27
      %s28 = sphi 0, %s25
      %s29 = sphi 0, %s28
      %s45 = sphi 0, %s29
      %s49 = sphi 0, %s49
      %s51 = sphi 0, %s49
      %s52 = sphi 0, %s51
      %s66 = sphi 0, %s52
      %s70 = sphi 0, %s70
      %s72 = sphi 0, %s70
      %s73 = sphi 0, %s72
      %s87 = sphi 0, %s73
      %s91 = sphi 0, %s91
      %s93 = sphi 0, %s91
      %s94 = sphi 0, %s93
      %s108 = sphi 0, %s94
      %s112 = sphi 0, %s112
      %s114 = sphi 0, %s112
      %s115 = sphi 0, %s114
      %s129 = sphi 0, %s115
      %s133 = sphi 0, %s133
      %s135 = sphi 0, %s133
      %s136 = sphi 0, %s135
      %s150 = sphi 0, %s136
      %s156 = sphi 0, %s158
      %s159 = sphi 0, %s156
      %s160 = sphi 0, %s159
      %s176 = sphi 0, %s160
    $region4: #{tpu_custom_call.1} parent=1 // loop_header_branch
      %18 = sbr.rel (%p16) target = $region8
    $region5: #{tpu_custom_call.1} parent=1 // loop_body
      %s20 = ssub.s32 %s15, 1
      %s21 = ssub.s32 %s15, 2
      %s22 = sadd.s32 %s15, 1
      %s23 = ssub.s32 %s15, %s22
      %p24 = scmp.eq.s32.totalorder %s23, 0
      %s26 = sadd.s32 %s25, 1
      %s27 = scalar_select %p24, %s25, %s26
      %p30 = pneg %p24
      %p31 = scmp.eq.s32.totalorder %s15, 1
      %p32 = por %p30, %p31
      %p33 = scmp.ne.s32.totalorder %s25, %s28
      %p34 = scmp.eq.s32.totalorder %s15, 0
      %p35 = por %p33, %p34
      %p36 = scmp.ne.s32.totalorder %s25, %s28
      %p37 = scmp.eq.s32.totalorder %s20, 1
      %p38 = por %p36, %p37
      %p39 = scmp.ne.s32.totalorder %s28, %s29
      %p40 = scmp.eq.s32.totalorder %s20, 0
      %p41 = por %p39, %p40
      %p42 = scmp.ne.s32.totalorder %s28, %s29
      %p43 = scmp.eq.s32.totalorder %s21, 1
      %p44 = por %p42, %p43
      %p46 = scmp.ne.s32.totalorder %s29, %s45
      %p47 = scmp.eq.s32.totalorder %s21, 0
      %p48 = por %p46, %p47
      %s50 = sadd.s32 %s49, 1
      %p53 = scmp.eq.s32.totalorder %s15, 1
      %p54 = scmp.ne.s32.totalorder %s49, %s51
      %p55 = scmp.eq.s32.totalorder %s15, 0
      %p56 = por %p54, %p55
      %p57 = scmp.ne.s32.totalorder %s49, %s51
      %p58 = scmp.eq.s32.totalorder %s20, 1
      %p59 = por %p57, %p58
      %p60 = scmp.ne.s32.totalorder %s51, %s52
      %p61 = scmp.eq.s32.totalorder %s20, 0
      %p62 = por %p60, %p61
      %p63 = scmp.ne.s32.totalorder %s51, %s52
      %p64 = scmp.eq.s32.totalorder %s21, 1
      %p65 = por %p63, %p64
      %p67 = scmp.ne.s32.totalorder %s52, %s66
      %p68 = scmp.eq.s32.totalorder %s21, 0
      %p69 = por %p67, %p68
      %s71 = sadd.s32 %s70, 1
      %p74 = scmp.eq.s32.totalorder %s15, 1
      %p75 = scmp.ne.s32.totalorder %s70, %s72
      %p76 = scmp.eq.s32.totalorder %s15, 0
      %p77 = por %p75, %p76
      %p78 = scmp.ne.s32.totalorder %s70, %s72
      %p79 = scmp.eq.s32.totalorder %s20, 1
      %p80 = por %p78, %p79
      %p81 = scmp.ne.s32.totalorder %s72, %s73
      %p82 = scmp.eq.s32.totalorder %s20, 0
      %p83 = por %p81, %p82
      %p84 = scmp.ne.s32.totalorder %s72, %s73
      %p85 = scmp.eq.s32.totalorder %s21, 1
      %p86 = por %p84, %p85
      %p88 = scmp.ne.s32.totalorder %s73, %s87
      %p89 = scmp.eq.s32.totalorder %s21, 0
      %p90 = por %p88, %p89
      %s92 = sadd.s32 %s91, 1
      %p95 = scmp.eq.s32.totalorder %s15, 1
      %p96 = scmp.ne.s32.totalorder %s91, %s93
      %p97 = scmp.eq.s32.totalorder %s15, 0
      %p98 = por %p96, %p97
      %p99 = scmp.ne.s32.totalorder %s91, %s93
      %p100 = scmp.eq.s32.totalorder %s20, 1
      %p101 = por %p99, %p100
      %p102 = scmp.ne.s32.totalorder %s93, %s94
      %p103 = scmp.eq.s32.totalorder %s20, 0
      %p104 = por %p102, %p103
      %p105 = scmp.ne.s32.totalorder %s93, %s94
      %p106 = scmp.eq.s32.totalorder %s21, 1
      %p107 = por %p105, %p106
      %p109 = scmp.ne.s32.totalorder %s94, %s108
      %p110 = scmp.eq.s32.totalorder %s21, 0
      %p111 = por %p109, %p110
      %s113 = sadd.s32 %s112, 1
      %p116 = scmp.eq.s32.totalorder %s15, 1
      %p117 = scmp.ne.s32.totalorder %s112, %s114
      %p118 = scmp.eq.s32.totalorder %s15, 0
      %p119 = por %p117, %p118
      %p120 = scmp.ne.s32.totalorder %s112, %s114
      %p121 = scmp.eq.s32.totalorder %s20, 1
      %p122 = por %p120, %p121
      %p123 = scmp.ne.s32.totalorder %s114, %s115
      %p124 = scmp.eq.s32.totalorder %s20, 0
      %p125 = por %p123, %p124
      %p126 = scmp.ne.s32.totalorder %s114, %s115
      %p127 = scmp.eq.s32.totalorder %s21, 1
      %p128 = por %p126, %p127
      %p130 = scmp.ne.s32.totalorder %s115, %s129
      %p131 = scmp.eq.s32.totalorder %s21, 0
      %p132 = por %p130, %p131
      %s134 = sadd.s32 %s133, 1
      %p137 = scmp.eq.s32.totalorder %s15, 1
      %p138 = scmp.ne.s32.totalorder %s133, %s135
      %p139 = scmp.eq.s32.totalorder %s15, 0
      %p140 = por %p138, %p139
      %p141 = scmp.ne.s32.totalorder %s133, %s135
      %p142 = scmp.eq.s32.totalorder %s20, 1
      %p143 = por %p141, %p142
      %p144 = scmp.ne.s32.totalorder %s135, %s136
      %p145 = scmp.eq.s32.totalorder %s20, 0
      %p146 = por %p144, %p145
      %p147 = scmp.ne.s32.totalorder %s135, %s136
      %p148 = scmp.eq.s32.totalorder %s21, 1
      %p149 = por %p147, %p148
      %p151 = scmp.ne.s32.totalorder %s136, %s150
      %p152 = scmp.eq.s32.totalorder %s21, 0
      %p153 = por %p151, %p152
      %s154 = ssub.s32 %s15, %s22
      %p155 = scmp.eq.s32.totalorder %s154, 0
      %s157 = sadd.s32 %s156, 1
      %s158 = scalar_select %p155, %s156, %s157
      %p161 = pneg %p155
      %p162 = scmp.eq.s32.totalorder %s15, 1
      %p163 = por %p161, %p162
      %p164 = scmp.ne.s32.totalorder %s156, %s159
      %p165 = scmp.eq.s32.totalorder %s15, 0
      %p166 = por %p164, %p165
      %p167 = scmp.ne.s32.totalorder %s156, %s159
      %p168 = scmp.eq.s32.totalorder %s20, 1
      %p169 = por %p167, %p168
      %p170 = scmp.ne.s32.totalorder %s159, %s160
      %p171 = scmp.eq.s32.totalorder %s20, 0
      %p172 = por %p170, %p171
      %p173 = scmp.ne.s32.totalorder %s159, %s160
      %p174 = scmp.eq.s32.totalorder %s21, 1
      %p175 = por %p173, %p174
      %p177 = scmp.ne.s32.totalorder %s160, %s176
      %p178 = scmp.eq.s32.totalorder %s21, 0
      %p179 = por %p177, %p178
      %p180 = scmp.le.s32.totalorder 1, %s15
      %p181 = scmp.lt.s32.totalorder %s15, 3
      %p182 = pnand %p180, %p181
      %p183 = pneg %p182
      // Predicated region
      $region9: #{tpu_custom_call.1} parent=5 // pred_check
        _
      $region10: #{tpu_custom_call.1} parent=5 // pred_check_branch
        %185 = sbr.rel (%p182) target = $region12
      $region11: #{tpu_custom_call.1} parent=5 // pred_region
        %s186 = ssub.s32 %s15, 1
        // Predicated region
        $region13: #{tpu_custom_call.1} parent=11 // pred_check
          %p187 = pneg %p62
        $region14: #{tpu_custom_call.1} parent=11 // pred_check_branch
          %189 = sbr.rel (%p187) target = $region16
        $region15: #{tpu_custom_call.1} parent=11 // pred_region
          _
        $region16: #{tpu_custom_call.1} parent=11 // pred_fallthru
          _
        // Predicated region
        $region17: #{tpu_custom_call.1} parent=11 // pred_check
          %p190 = pneg %p83
        $region18: #{tpu_custom_call.1} parent=11 // pred_check_branch
          %192 = sbr.rel (%p190) target = $region20
        $region19: #{tpu_custom_call.1} parent=11 // pred_region
          _
        $region20: #{tpu_custom_call.1} parent=11 // pred_fallthru
          _
        // Predicated region
        $region21: #{tpu_custom_call.1} parent=11 // pred_check
          %p193 = pneg %p104
        $region22: #{tpu_custom_call.1} parent=11 // pred_check_branch
          %195 = sbr.rel (%p193) target = $region24
        $region23: #{tpu_custom_call.1} parent=11 // pred_region
          _
        $region24: #{tpu_custom_call.1} parent=11 // pred_fallthru
          _
        // Predicated region
        $region25: #{tpu_custom_call.1} parent=11 // pred_check
          %p196 = pneg %p125
        $region26: #{tpu_custom_call.1} parent=11 // pred_check_branch
          %198 = sbr.rel (%p196) target = $region28
        $region27: #{tpu_custom_call.1} parent=11 // pred_region
          _
        $region28: #{tpu_custom_call.1} parent=11 // pred_fallthru
          _
        // Predicated region
        $region29: #{tpu_custom_call.1} parent=11 // pred_check
          %p199 = pneg %p146
        $region30: #{tpu_custom_call.1} parent=11 // pred_check_branch
          %201 = sbr.rel (%p199) target = $region32
        $region31: #{tpu_custom_call.1} parent=11 // pred_region
          _
        $region32: #{tpu_custom_call.1} parent=11 // pred_fallthru
          _
      $region12: #{tpu_custom_call.1} parent=5 // pred_fallthru
        _
      %p202 = scmp.lt.s32.totalorder %s15, 2
      // Predicated region
      $region33: #{tpu_custom_call.1} parent=5 // pred_check
        %p203 = pneg %p202
      $region34: #{tpu_custom_call.1} parent=5 // pred_check_branch
        %205 = sbr.rel (%p203) target = $region36
      $region35: #{tpu_custom_call.1} parent=5 // pred_region
        // Predicated region
        $region37: #{tpu_custom_call.1} parent=35 // pred_check
          %p206 = pneg %p35
        $region38: #{tpu_custom_call.1} parent=35 // pred_check_branch
          %208 = sbr.rel (%p206) target = $region40
        $region39: #{tpu_custom_call.1} parent=35 // pred_region
          %p209 = scmp.lt.s32.totalorder %s15, 1
          %s210 = scalar_select %p209, %s15, 1
          %s211 = smul.addr %s210, 4
          %s212 = scalar_lea.vmem %s0, %s211
        $region40: #{tpu_custom_call.1} parent=35 // pred_fallthru
          _
      $region36: #{tpu_custom_call.1} parent=5 // pred_fallthru
        _
      %p213 = scmp.le.s32.totalorder 1, %s15
      %p214 = scmp.lt.s32.totalorder %s15, 3
      %p215 = pnand %p213, %p214
      %p216 = pneg %p215
      // Predicated region
      $region41: #{tpu_custom_call.1} parent=5 // pred_check
        _
      $region42: #{tpu_custom_call.1} parent=5 // pred_check_branch
        %218 = sbr.rel (%p215) target = $region44
      $region43: #{tpu_custom_call.1} parent=5 // pred_region
        %s219 = ssub.s32 %s15, 1
        %p220 = scmp.lt.s32.totalorder %s20, 1
        %s221 = scalar_select %p220, %s20, 1
        %s222 = smul.addr %s221, 4
        %s223 = scalar_lea.vmem %s0, %s222
        %p224 = pneg %p41
        %p225 = pneg %p38
        %p226 = pneg %p62
        %p227 = pneg %p59
        %p228 = pneg %p83
        %p229 = pneg %p80
        %p230 = pneg %p104
        %p231 = pneg %p101
        %p232 = pneg %p125
        %p233 = pneg %p122
        %p234 = pneg %p146
        %p235 = pneg %p143
        %p236 = pneg %p172
        %p237 = pneg %p169
        %s238 = sand.u32 %s159, 1
        %s239 = scalar_lea.sflag [#allocation4], %s238
        %s240 = sand.u32 %s159, 1
        %s241 = smul.addr %s240, 8
        %s242 = scalar_lea.vmem [#allocation3], %s241
        %p243 = scmp.lt.s32.totalorder %s20, 1
        %s244 = scalar_select %p243, %s20, 1
        %s245 = smul.addr %s244, 4
        %s246 = scalar_lea.vmem %s0, %s245
        %vm247 = vcmask 3072
        %248 = vst.msk [vmem:[#allocation2] sm:$0xf] %vm247, 0.0
        %vm249 = vcmask 142472
        %250 = vst.msk [vmem:[#allocation2] sm:$0xf] %vm249, 0.0
        %v251 = vld [vmem:[%s246] sm:$0xf]
        %253 = vrot.lane.b32.xlu0 %v251, 1
        %v254 = vpop.permute.xlu0 %253
        %vm256 = vcmask 134152
        %257 = vst.msk [vmem:[#allocation2] sm:$0xf] %vm256, %v254
        %v258 = vld [vmem:[#allocation2] sm:$0xf]
        %v259 = vld [vmem:[%s1] sm:$0xf]
        %261 = vset.pattern.permute.xlu0 0
        %262 = vperm.xlu0 %261, %v259
        %v263 = vpop.permute.xlu0 %262
        %v265 = vmul.f32 %v258, %v263
        %266 = vset.pattern.permute.xlu0 1
        %267 = vperm.xlu0 %266, %v259
        %v268 = vpop.permute.xlu0 %267
        %v270 = vmul.f32 %v258, %v268
        %272 = vrot.lane.b32.xlu0 %v270, 127
        %v273 = vpop.permute.xlu0 %272
        %v275 = vadd.f32 %v265, %v273
        %276 = vset.pattern.permute.xlu0 2
        %277 = vperm.xlu0 %276, %v259
        %v278 = vpop.permute.xlu0 %277
        %v280 = vmul.f32 %v258, %v278
        %282 = vrot.lane.b32.xlu0 %v280, 126
        %v283 = vpop.permute.xlu0 %282
        %v285 = vadd.f32 %v275, %v283
        %v286 = vld [vmem:[%s2] sm:$0xff]
        %v287 = vld [vmem:[%s3] sm:$0xff]
        %289 = vset.pattern.permute.xlu0 0
        %290 = vperm.xlu0 %289, %v287
        %v291 = vpop.permute.xlu0 %290
        %vm293 = vcmask 31744
        %v295 = vsel %vm293, %v286, 0
        %vm297 = vcmask 1043456
        %v299 = vsel %vm297, %v285, 0
        %301 = vmatpush.msra.mxu0 0.0
        %302 = vmatpush.msra.mxu0 0.0
        %303 = vmatpush.msra.mxu0 0.0
        %304 = vmatpush.msra.mxu0 0.0
        %305 = vmatpush.msra.mxu0 0.0
        %306 = vmatpush.msra.mxu0 0.0
        %307 = vmatpush.msra.mxu0 0.0
        %308 = vmatpush.msra.mxu0 0.0
        %309 = vmatpush.msra.mxu0 0.0
        %310 = vmatpush.msra.mxu0 0.0
        %311 = vmatpush.msra.mxu0 0.0
        %312 = vmatpush.msra.mxu0 0.0
        %313 = vmatpush.msra.mxu0 0.0
        %314 = vmatpush.msra.mxu0 0.0
        %315 = vmatpush.msra.mxu0 0.0
        %316 = vmatpush.msra.mxu0 %v299
        %317 = vmatmul.f32.gmra.mxu0 %v295
        %v318 = vpop.f32.mrf.mxu0
        %v319 = vadd.f32 %v291, %v318
        %320 = vdwg.mxu0
        %v321 = vmax.f32 %v319, 0.0
        %v322 = vld [vmem:[%s4] sm:$0xff]
        %324 = vset.pattern.permute.xlu0 0
        %325 = vperm.xlu0 %324, %v322
        %v326 = vpop.permute.xlu0 %325
        %v328 = vmul.f32 %v321, %v326
        %v329 = vld [vmem:[%s5] sm:$0xff]
        %331 = vset.pattern.permute.xlu0 0
        %332 = vperm.xlu0 %331, %v329
        %v333 = vpop.permute.xlu0 %332
        %v335 = vadd.f32 %v328, %v333
        %vm336 = vcmask 130048
        %337 = vst.msk [vmem:[%s242] sm:$0xff] %vm336, %v335
        %s338 = sand.u32 %s159, 1
        %s339 = scalar_lea.sflag [#allocation4], %s338
        %s340 = sand.u32 %s159, 1
        %s341 = smul.addr %s340, 8
        %s342 = scalar_lea.vmem [#allocation3], %s341
        // Predicated region
        $region45: #{tpu_custom_call.1} parent=43 // pred_check
          %p343 = pneg %p169
        $region46: #{tpu_custom_call.1} parent=43 // pred_check_branch
          %345 = sbr.rel (%p343) target = $region48
        $region47: #{tpu_custom_call.1} parent=43 // pred_region
          %347 = vsyncadd %s339, 0
          %s348 = smul.addr %s20, 8
          %s349 = scalar_lea.hbm %s6, %s348
          %s351 = sshll.u32 %s342, 4
          %s352 = int_to_ptr.vmem [resolvable:$true] %s351
          %s353 = sshll.u32 %s349, 4
          %s354 = int_to_ptr.hbm [resolvable:$true] %s353
          %356 = dma.vmem_to_hbm [thread:$0]  %s352, 128, %s354, %s339
        $region48: #{tpu_custom_call.1} parent=43 // pred_fallthru
          _
      $region44: #{tpu_custom_call.1} parent=5 // pred_fallthru
        _
      %p357 = scmp.le.s32.totalorder 2, %s15
      // Predicated region
      $region49: #{tpu_custom_call.1} parent=5 // pred_check
        %p358 = pneg %p357
      $region50: #{tpu_custom_call.1} parent=5 // pred_check_branch
        %360 = sbr.rel (%p358) target = $region52
      $region51: #{tpu_custom_call.1} parent=5 // pred_region
        %s361 = ssub.s32 %s15, 2
        // Predicated region
        $region53: #{tpu_custom_call.1} parent=51 // pred_check
          %p362 = pneg %p175
        $region54: #{tpu_custom_call.1} parent=51 // pred_check_branch
          %364 = sbr.rel (%p362) target = $region56
        $region55: #{tpu_custom_call.1} parent=51 // pred_region
          %s365 = sand.u32 %s160, 1
          %s366 = scalar_lea.sflag [#allocation4], %s365
          %s367 = sand.u32 %s160, 1
          %s368 = smul.addr %s367, 8
          %s369 = scalar_lea.vmem [#allocation3], %s368
          %371 = dma.done %s366, 128
        $region56: #{tpu_custom_call.1} parent=51 // pred_fallthru
          _
      $region52: #{tpu_custom_call.1} parent=5 // pred_fallthru
        _
    $region6: #{tpu_custom_call.1} parent=1 // loop_footer
      %s19 = sadd.s32 1, %s15
    $region7: #{tpu_custom_call.1} parent=1 // loop_footer_branch
      %14 = sbr.rel target = $region3
    $region8: #{tpu_custom_call.1} parent=1 // loop_exit
      _
    %372 = vsyncpa [#allocation4], 1
    %s373 = scalar_lea.sflag [#allocation4], 1
    %374 = vsyncpa %s373, 1

</llo_original>
